<compile_context>
chip_gen: v5e
topology: v5e:2x2
jax: 0.10.0
libtpu: 0.0.40
codegen_flags: <defaults>
</compile_context>

<pallas_src>
import random

import jax
import jax.numpy as jnp
from jax.experimental import pallas as pl
from jax.experimental.pallas import tpu as pltpu


def _make_sharpness_kernel(width, plane):
    """Build the kernel over (bp, H*W) blocks; `width`/`plane` are static."""

    def kernel(blend_ref, x_ref, o_ref):
        x = x_ref[...].astype(jnp.float32)                         # (bp, H*W)

        # 3x3 smoothing kernel [[1,1,1],[1,5,1],[1,1,1]]/13 =
        # (3x3 all-ones sum + 4*centre)/13.  Neighbours on the flattened
        # plane axis sit at +-1 (columns) and +-width (rows); rolls are
        # cyclic, so only border pixels are contaminated and the blend mask
        # (zero there) restores them to the original value.
        t = x + pltpu.roll(x, 1, axis=1) + pltpu.roll(x, plane - 1, axis=1)
        s = t + pltpu.roll(t, width, axis=1) + pltpu.roll(t, plane - width, axis=1)
        blurred = (s + 4.0 * x) * (1.0 / 13.0)

        # blend = (1 - factor) * interior_mask  (resident (1, H*W) input):
        #   out = f*x + (1-f)*degenerate  ==  x + (1-f)*mask*(blurred - x)
        out = x + blend_ref[...] * (blurred - x)
        o_ref[...] = jnp.clip(out, 0.0, 1.0).astype(o_ref.dtype)

    return kernel


def adjust_sharpness(x, sharpness_factor):
    """Pallas equivalent of torchvision v2 adjust_sharpness on NCHW floats."""
    n, c, h, w = x.shape
    if h <= 2 or w <= 2:               # torchvision: image returned unchanged
        return x

    nc = n * c
    plane = h * w
    x2 = x.reshape(nc, plane)          # free row-major reshape; lane-dense minor axis

    # --- block sizing --------------------------------------------------------
    # Target ~2 MiB of f32 per block.  Keep the second-minor block dim either
    # a multiple of 8 or the full nc extent (layout legality).  For nc > 8 cap
    # at ceil(nc/2) so the "parallel" grid axis has >= 2 steps (both v7x TCs).
    target_elems = 512 * 1024
    want = max(1, target_elems // plane)
    if nc > 8:
        want = min(want, -(-nc // 2))
    if want >= nc:
        bp = nc
    else:
        bp = min(max(8, (want // 8) * 8), nc)
    grid = pl.cdiv(nc, bp)

    # Scoped-VMEM budget: double-buffered in/out blocks plus a few full-block
    # f32 temporaries.  32 MiB covers the common case on all generations (v5e
    # default is only 16 MiB); very large planes bump it, capped well under
    # v7x's 64 MiB physical VMEM.
    # TODO(synk): planes much larger than ~4 MiB of f32 should be row-tiled
    # with a 1-row halo instead of relying on a bigger VMEM limit.
    block_f32_bytes = bp * plane * 4
    in_block_bytes = bp * plane * x.dtype.itemsize
    vmem_need = 2 * in_block_bytes + 8 * block_f32_bytes
    vmem_limit = int(min(max(32 * 1024 * 1024, vmem_need), 56 * 1024 * 1024))

    # Interior mask (zero on the 1-pixel border), pre-scaled by (1 - factor)
    # so the kernel does a single fused multiply-add per pixel for the blend.
    # The factor enters through data (not a baked constant), so a new factor
    # never triggers a Mosaic recompile.
    rows = jnp.arange(h, dtype=jnp.int32)
    cols = jnp.arange(w, dtype=jnp.int32)
    interior = (((rows > 0) & (rows < h - 1))[:, None]
                & ((cols > 0) & (cols < w - 1))[None, :])
    factor = jnp.asarray(sharpness_factor, dtype=jnp.float32)
    blend = ((1.0 - factor) * interior.astype(jnp.float32)).reshape(1, plane)

    out2 = pl.pallas_call(
        _make_sharpness_kernel(w, plane),
        out_shape=jax.ShapeDtypeStruct((nc, plane), x.dtype),
        grid=(grid,),
        in_specs=[
            # Constant block index -> the blend mask stays resident in VMEM.
            pl.BlockSpec((1, plane), lambda i: (0, 0)),
            pl.BlockSpec((bp, plane), lambda i: (i, 0)),
        ],
        out_specs=pl.BlockSpec((bp, plane), lambda i: (i, 0)),
        compiler_params=pltpu.CompilerParams(
            dimension_semantics=("parallel",),
            vmem_limit_bytes=vmem_limit),
        # TODO(synk): in a data-augmentation pipeline where the input is dead
        # after the call, add input_output_aliases={1: 0} to drop the separate
        # output HBM allocation (omitted here because the test reuses x).
    )(blend, x2)
    return out2.reshape(n, c, h, w)


def sharpness_forward(x, sharpness_factor, apply):
    """Sharpness.forward: RandomAdjustSharpness applies with p=0.5."""
    # TODO(synk): the construction-time U(0.1, 1.9) factor draw and the
    # per-forward Bernoulli(p=0.5) gate are host-side Python `random` glue.
    return adjust_sharpness(x, sharpness_factor) if apply else x


def _adjust_sharpness_ref(x, sharpness_factor):
    """Pure-JAX reference (mirrors torchvision's float path) for validation."""
    n, c, h, w = x.shape
    k = jnp.array([[1.0, 1.0, 1.0], [1.0, 5.0, 1.0], [1.0, 1.0, 1.0]],
                  jnp.float32) / 13.0
    x32 = x.astype(jnp.float32)
    blur = jax.lax.conv_general_dilated(
        x32.reshape(n * c, 1, h, w), k.reshape(1, 1, 3, 3),
        window_strides=(1, 1), padding="VALID").reshape(n, c, h - 2, w - 2)
    degenerate = x32.at[:, :, 1:-1, 1:-1].set(blur)
    out = sharpness_factor * x32 + (1.0 - sharpness_factor) * degenerate
    return jnp.clip(out, 0.0, 1.0).astype(x.dtype)


if __name__ == "__main__":
    key = jax.random.PRNGKey(0)
    # Small NCHW image batch in [0, 1): batch=2, channels=4, 16x16 spatial.
    x = jax.random.uniform(key, (2, 4, 16, 16), dtype=jnp.float32)

    # Deterministic stand-in for the module's construction-time randomness.
    sharpness_factor = random.Random(0).uniform(0.1, 1.9)

    ref = _adjust_sharpness_ref(x, sharpness_factor)

    out = sharpness_forward(x, sharpness_factor, apply=True)
    out = jax.block_until_ready(out)

    assert out.shape == x.shape, out.shape
    assert out.dtype == x.dtype, out.dtype
    assert bool(jnp.all(jnp.isfinite(out)))
    assert bool(jnp.allclose(out, ref, atol=1e-5, rtol=1e-5)), (
        float(jnp.max(jnp.abs(out - ref))))

    print("KERNEL_OK")
</pallas_src>

<mosaic_0001>
module attributes {stable_mosaic.version = 11 : i64} {
  func.func @kernel(%arg0: i32, %arg1: memref<1x256xf32, #tpu.memory_space<vmem>>, %arg2: memref<8x256xf32, #tpu.memory_space<vmem>>, %arg3: memref<8x256xf32, #tpu.memory_space<vmem>>) attributes {dimension_semantics = [#tpu.dimension_semantics<parallel>], iteration_bounds = array<i64: 1>, scalar_prefetch = 0 : i64, scratch_operands = 0 : i64, tpu.core_type = #tpu.core_type<tc>, window_params = [{pipeline_mode = #tpu.pipeline_mode<synchronous>, transform_indices = @transform_0, window_bounds = array<i64: 1, 256>}, {transform_indices = @transform_1, window_bounds = array<i64: 8, 256>}, {transform_indices = @transform_2, window_bounds = array<i64: 8, 256>}]} {
    %c0 = arith.constant 0 : index
    %c0_0 = arith.constant 0 : index
    %0 = vector.load %arg2[%c0, %c0_0] : memref<8x256xf32, #tpu.memory_space<vmem>>, vector<8x256xf32>
    %c1_i32 = arith.constant 1 : i32
    %1 = tpu.dynamic_rotate %0 by %c1_i32 dim 1 : vector<8x256xf32>, i32 -> vector<8x256xf32>
    %2 = arith.addf %0, %1 : vector<8x256xf32>
    %c255_i32 = arith.constant 255 : i32
    %3 = tpu.dynamic_rotate %0 by %c255_i32 dim 1 : vector<8x256xf32>, i32 -> vector<8x256xf32>
    %4 = arith.addf %2, %3 : vector<8x256xf32>
    %c16_i32 = arith.constant 16 : i32
    %5 = tpu.dynamic_rotate %4 by %c16_i32 dim 1 : vector<8x256xf32>, i32 -> vector<8x256xf32>
    %6 = arith.addf %4, %5 : vector<8x256xf32>
    %c240_i32 = arith.constant 240 : i32
    %7 = tpu.dynamic_rotate %4 by %c240_i32 dim 1 : vector<8x256xf32>, i32 -> vector<8x256xf32>
    %8 = arith.addf %6, %7 : vector<8x256xf32>
    %cst = arith.constant 4.000000e+00 : f32
    %9 = vector.broadcast %cst : f32 to vector<8x256xf32>
    %10 = arith.mulf %9, %0 : vector<8x256xf32>
    %11 = arith.addf %8, %10 : vector<8x256xf32>
    %cst_1 = arith.constant 0.0769230798 : f32
    %12 = vector.broadcast %cst_1 : f32 to vector<8x256xf32>
    %13 = arith.mulf %11, %12 : vector<8x256xf32>
    %c0_2 = arith.constant 0 : index
    %c0_3 = arith.constant 0 : index
    %14 = vector.load %arg1[%c0_2, %c0_3] : memref<1x256xf32, #tpu.memory_space<vmem>>, vector<1x256xf32>
    %15 = arith.subf %13, %0 : vector<8x256xf32>
    %16 = vector.broadcast %14 : vector<1x256xf32> to vector<8x256xf32>
    %17 = arith.mulf %16, %15 : vector<8x256xf32>
    %18 = arith.addf %0, %17 : vector<8x256xf32>
    %cst_4 = arith.constant 0.000000e+00 : f32
    %cst_5 = arith.constant 1.000000e+00 : f32
    %19 = vector.broadcast %cst_4 : f32 to vector<8x256xf32>
    %20 = arith.maximumf %19, %18 : vector<8x256xf32>
    %21 = vector.broadcast %cst_5 : f32 to vector<8x256xf32>
    %22 = arith.minimumf %21, %20 : vector<8x256xf32>
    %c0_6 = arith.constant 0 : index
    %c0_7 = arith.constant 0 : index
    %23 = vector.load %arg3[%c0_6, %c0_7] : memref<8x256xf32, #tpu.memory_space<vmem>>, vector<8x256xf32>
    tpu.vector_store %arg3[%c0_6, %c0_7], %22 {strides = array<i32>} : memref<8x256xf32, #tpu.memory_space<vmem>>, vector<8x256xf32>,
    return
  }
  func.func @transform_0(%arg0: i32) -> (i32, i32) {
    %c0_i32 = arith.constant 0 : i32
    %c0_i32_0 = arith.constant 0 : i32
    %c0_i32_1 = arith.constant 0 : i32
    return %c0_i32, %c0_i32_0 : i32, i32
  }
  func.func @transform_1(%arg0: i32) -> (i32, i32) {
    %c0_i32 = arith.constant 0 : i32
    %c0_i32_0 = arith.constant 0 : i32
    return %arg0, %c0_i32 : i32, i32
  }
  func.func @transform_2(%arg0: i32) -> (i32, i32) {
    %c0_i32 = arith.constant 0 : i32
    %c0_i32_0 = arith.constant 0 : i32
    return %arg0, %c0_i32 : i32, i32
  }
}

</mosaic_0001>

<llo_original>
// kernel: tpu_custom_call.1
$region0: #{tpu_custom_call.1}
  #allocation0 [shape = 'u32[]', space=smem, size = 0x4, offset = 0x4, fixed_abs, tag = 'smem constant byte address 0x4 - core index']
  #allocation1 [shape = 'u32[72,128]{1,0:T(1,128)}', space=vmem, size = 0x9000, scoped, tag = 'internal scratch']
  %s0 = inlined_call_operand.hbm [shape: f32[1,256], index: 0, kind: input, shape index: {}]
  %s1 = inlined_call_operand.hbm [shape: f32[8,256], index: 1, kind: input, shape index: {}]
  %s2 = inlined_call_operand.hbm [shape: f32[8,256], index: 2, kind: output, shape index: {}]
  %s3 = sld [smem:[#allocation0]]
  $region26: #{tpu_custom_call.1} parent=0
    _
  %s5 = ssub.s32 1, %s3
  %s6 = scalar_select 0, %s5, %s3
  $region1: #{tpu_custom_call.1} parent=0
    #allocation2 [shape = 'u8[1024]{0}', space=vmem, size = 0x400, scoped, tag = 'input window, operand 0, single buffered']
    #allocation3 [shape = 's32[1]{0}', space=sflag, size = 0x4, scoped, tag = 'scoped memory for tpu_custom_call.1']
    #allocation4 [shape = 's32[1]{0}', space=sflag, size = 0x4, scoped, tag = 'scoped memory for tpu_custom_call.1']
    #allocation5 [shape = 'u8[8192]{0}', space=vmem, size = 0x2000, scoped, tag = 'input window, operand 1, single buffered']
    #allocation6 [shape = 's32[1]{0}', space=sflag, size = 0x4, scoped, tag = 'scoped memory for tpu_custom_call.1']
    #allocation7 [shape = 'u8[8192]{0}', space=vmem, size = 0x2000, scoped, tag = 'output window, operand 0, single buffered']
    %7 = vsyncpa [#allocation3], 0
    %8 = vsyncpa [#allocation6], 0
    %9 = vsyncpa [#allocation4], 0
    // Predicated region
    $region2: #{tpu_custom_call.1} parent=1 // pred_check
      _
    $region3: #{tpu_custom_call.1} parent=1 // pred_check_branch
      %11 = sbr.rel (0) target = $region5
    $region4: #{tpu_custom_call.1} parent=1 // pred_region
      %13 = vsyncadd [#allocation3], 0
      %s15 = sshll.u32 %s0, 4
      %s16 = int_to_ptr.hbm [resolvable:$true] %s15
      %s17 = sshll.u32 [#allocation2], 4
      %s18 = int_to_ptr.vmem [resolvable:$true] %s17
      %20 = dma.hbm_to_vmem [thread:$0]  %s16, 32, %s18, [#allocation3]
    $region5: #{tpu_custom_call.1} parent=1 // pred_fallthru
      _
    // Predicated region
    $region6: #{tpu_custom_call.1} parent=1 // pred_check
      _
    $region7: #{tpu_custom_call.1} parent=1 // pred_check_branch
      %22 = sbr.rel (0) target = $region9
    $region8: #{tpu_custom_call.1} parent=1 // pred_region
      %24 = vsyncadd [#allocation6], 0
      %s26 = sshll.u32 %s1, 4
      %s27 = int_to_ptr.hbm [resolvable:$true] %s26
      %s28 = sshll.u32 [#allocation5], 4
      %s29 = int_to_ptr.vmem [resolvable:$true] %s28
      %31 = dma.hbm_to_vmem [thread:$0]  %s27, 256, %s29, [#allocation6]
    $region9: #{tpu_custom_call.1} parent=1 // pred_fallthru
      _
    // Predicated region
    $region10: #{tpu_custom_call.1} parent=1 // pred_check
      _
    $region11: #{tpu_custom_call.1} parent=1 // pred_check_branch
      %33 = sbr.rel (0) target = $region13
    $region12: #{tpu_custom_call.1} parent=1 // pred_region
      %35 = dma.done [#allocation3], 32
    $region13: #{tpu_custom_call.1} parent=1 // pred_fallthru
      _
    // Predicated region
    $region14: #{tpu_custom_call.1} parent=1 // pred_check
      _
    $region15: #{tpu_custom_call.1} parent=1 // pred_check_branch
      %37 = sbr.rel (0) target = $region17
    $region16: #{tpu_custom_call.1} parent=1 // pred_region
      %39 = dma.done [#allocation6], 256
    $region17: #{tpu_custom_call.1} parent=1 // pred_fallthru
      _
    %v40 = vld [vmem:[#allocation5] sm:$0xff]
    %v41 = vld [vmem:[#allocation5 + $0x8] sm:$0xff]
    %42 = vrot.lane.b32.xlu0 %v40, 1
    %v43 = vpop.permute.xlu0 %42
    %44 = vrot.lane.b32.xlu0 %v41, 1
    %v45 = vpop.permute.xlu0 %44
    %v46 = vlaneseq
    %v47 = vand.u32 %v46, 127
    %vm48 = vcmp.lt.s32.totalorder %v47, 1
    %v49 = vsel %vm48, %v43, %v45
    %v50 = vsel %vm48, %v45, %v43
    %v51 = vadd.f32 %v40, %v50
    %v52 = vadd.f32 %v41, %v49
    %53 = vrot.lane.b32.xlu0 %v40, 127
    %v54 = vpop.permute.xlu0 %53
    %55 = vrot.lane.b32.xlu0 %v41, 127
    %v56 = vpop.permute.xlu0 %55
    %vm57 = vcmp.lt.s32.totalorder %v47, 127
    %v58 = vsel %vm57, %v54, %v56
    %v59 = vsel %vm57, %v56, %v54
    %v60 = vadd.f32 %v51, %v58
    %v61 = vadd.f32 %v52, %v59
    %62 = vrot.lane.b32.xlu0 %v60, 16
    %v63 = vpop.permute.xlu0 %62
    %64 = vrot.lane.b32.xlu0 %v61, 16
    %v65 = vpop.permute.xlu0 %64
    %vm66 = vcmp.lt.s32.totalorder %v47, 16
    %v67 = vsel %vm66, %v63, %v65
    %v68 = vsel %vm66, %v65, %v63
    %v69 = vadd.f32 %v60, %v68
    %v70 = vadd.f32 %v61, %v67
    %71 = vrot.lane.b32.xlu0 %v60, 112
    %v72 = vpop.permute.xlu0 %71
    %73 = vrot.lane.b32.xlu0 %v61, 112
    %v74 = vpop.permute.xlu0 %73
    %vm75 = vcmp.lt.s32.totalorder %v47, 112
    %v76 = vsel %vm75, %v72, %v74
    %v77 = vsel %vm75, %v74, %v72
    %v78 = vadd.f32 %v69, %v76
    %v79 = vadd.f32 %v70, %v77
    %v80 = vmul.f32 %v40, 4.0
    %v81 = vmul.f32 %v41, 4.0
    %v82 = vadd.f32 %v78, %v80
    %v83 = vadd.f32 %v79, %v81
    %v84 = vmul.f32 %v82, 0.07692308
    %v85 = vmul.f32 %v83, 0.07692308
    %v86 = vld [vmem:[#allocation2] sm:$0x3]
    %v87 = vsub.f32 %v84, %v40
    %v88 = vsub.f32 %v85, %v41
    %v90 = vperm.slane %v86, 0
    %v91 = vperm.slane %v86, 1
    %v94 = vmul.f32 %v90, %v87
    %v95 = vmul.f32 %v91, %v88
    %v96 = vadd.f32 %v40, %v94
    %v97 = vadd.f32 %v41, %v95
    %v98 = vmax.f32 %v96, 0.0
    %v99 = vmax.f32 %v97, 0.0
    %v100 = vmin.f32 %v98, 1.0
    %v101 = vmin.f32 %v99, 1.0
    %102 = vst [vmem:[#allocation7] sm:$0xff] %v100
    %103 = vst [vmem:[#allocation7 + $0x8] sm:$0xff] %v101
    // Predicated region
    $region18: #{tpu_custom_call.1} parent=1 // pred_check
      _
    $region19: #{tpu_custom_call.1} parent=1 // pred_check_branch
      %105 = sbr.rel (0) target = $region21
    $region20: #{tpu_custom_call.1} parent=1 // pred_region
      %107 = vsyncadd [#allocation4], 0
      %s109 = sshll.u32 [#allocation7], 4
      %s110 = int_to_ptr.vmem [resolvable:$true] %s109
      %s111 = sshll.u32 %s2, 4
      %s112 = int_to_ptr.hbm [resolvable:$true] %s111
      %114 = dma.vmem_to_hbm [thread:$0]  %s110, 256, %s112, [#allocation4]
    $region21: #{tpu_custom_call.1} parent=1 // pred_fallthru
      _
    // Predicated region
    $region22: #{tpu_custom_call.1} parent=1 // pred_check
      _
    $region23: #{tpu_custom_call.1} parent=1 // pred_check_branch
      %116 = sbr.rel (0) target = $region25
    $region24: #{tpu_custom_call.1} parent=1 // pred_region
      %118 = dma.done [#allocation4], 256
    $region25: #{tpu_custom_call.1} parent=1 // pred_fallthru
      _
    %119 = vsyncpa [#allocation3], 1
    %120 = vsyncpa [#allocation6], 1
    %121 = vsyncpa [#allocation4], 1

</llo_original>
